<compile_context>
chip_gen: v7x
topology: tpu7x:2x2x1
jax: 0.10.0
libtpu: 0.0.40
codegen_flags: <defaults>
</compile_context>

<pallas_src>
import jax
import jax.numpy as jnp
from jax.experimental import pallas as pl
from jax.experimental.pallas import tpu as pltpu

L2_EPS = 1e-12   # matches l2normalize() in the PyTorch module


def _pick_bn(n, max_bn=8):
    """Largest divisor of n that is <= max_bn while keeping >= 2 grid steps."""
    best = 1
    for bn in range(1, min(n, max_bn) + 1):
        if n % bn == 0 and n // bn >= 2:
            best = bn
    return best


def spectral_norm_conv2d_forward(x_nchw, weight_oihw, bias, u):
    """Forward of SpectralNorm(nn.Conv2d(Cin, Cout, 3, padding=1)).

    Returns (y_nchw, u_new, v_new)."""
    N, Cin, H, Wsp = x_nchw.shape
    Cout = weight_oihw.shape[0]
    HW = H * Wsp
    K = Cin * 9                                  # width of w.view(Cout, -1)
    Cp = ((Cin + 7) // 8) * 8                    # channel pad -> aligned sublanes
    Kp = Cp * 9
    Bn = _pick_bn(N)                             # batch elements per grid step

    # ---- layout prep (cheap, done once in the wrapper) --------------------
    # x is NOT channel-padded anymore (no extra HBM copy / 2x read traffic).
    x_flat = x_nchw.reshape(N, Cin, HW).astype(jnp.float32)
    # Power-iteration weight in PyTorch order (Cout, Cin*9).
    w_pi = weight_oihw.reshape(Cout, K).astype(jnp.float32)
    # Matmul weight in tap-major order (dy, dx, c), channel-padded to Cp.
    if Cp != Cin:
        w_pad = jnp.pad(weight_oihw, ((0, 0), (0, Cp - Cin), (0, 0), (0, 0)))
    else:
        w_pad = weight_oihw
    w_mm = jnp.transpose(w_pad, (0, 2, 3, 1)).reshape(Cout, Kp).astype(jnp.float32)
    b_col = bias.reshape(Cout, 1).astype(jnp.float32)
    u_col = u.reshape(Cout, 1).astype(jnp.float32)

    # Column-validity masks for the left / right taps (built once).
    col = jnp.arange(HW, dtype=jnp.int32) % Wsp
    m_not_first = (col != 0).astype(jnp.float32).reshape(1, HW)
    m_not_last = (col != Wsp - 1).astype(jnp.float32).reshape(1, HW)

    # Flat zero-padding: interior placed at a 128-aligned lane offset.
    PADL = ((Wsp + 1 + 127) // 128) * 128
    pad_w = HW + 2 * PADL

    # ------------------------------------------------------------------
    # Kernel 1: spectral-norm power iteration (runs ONCE per forward).
    # Also folds 1/sigma into the conv matmul weight so the conv kernel
    # needs no per-step scale.
    # ------------------------------------------------------------------
    def power_kernel(wpi_ref, wmm_ref, u_ref, u_out_ref, v_out_ref, wsn_ref):
        w_flat = wpi_ref[...]                                   # (Cout, K)
        u0 = u_ref[...]                                         # (Cout, 1)
        v_num = jnp.sum(w_flat * u0, axis=0, keepdims=True)     # (1, K) = W^T u
        v = v_num / (jnp.sqrt(jnp.sum(v_num * v_num, axis=1,
                                      keepdims=True)) + L2_EPS)
        wv = jnp.sum(w_flat * v, axis=1, keepdims=True)         # (Cout, 1) = W v
        u_new = wv / (jnp.sqrt(jnp.sum(wv * wv, axis=0,
                                       keepdims=True)) + L2_EPS)
        sigma = jnp.sum(u_new * wv, axis=0, keepdims=True)      # (1, 1)
        u_out_ref[...] = u_new
        v_out_ref[...] = v
        wsn_ref[...] = wmm_ref[...] / sigma                     # W / sigma

    u_out, v_out, w_sn = pl.pallas_call(
        power_kernel,
        out_shape=(
            jax.ShapeDtypeStruct((Cout, 1), jnp.float32),
            jax.ShapeDtypeStruct((1, K), jnp.float32),
            jax.ShapeDtypeStruct((Cout, Kp), jnp.float32),
        ),
        grid=(1,),
        in_specs=[
            pl.BlockSpec((Cout, K), lambda i: (0, 0)),
            pl.BlockSpec((Cout, Kp), lambda i: (0, 0)),
            pl.BlockSpec((Cout, 1), lambda i: (0, 0)),
        ],
        out_specs=(
            pl.BlockSpec((Cout, 1), lambda i: (0, 0)),
            pl.BlockSpec((1, K), lambda i: (0, 0)),
            pl.BlockSpec((Cout, Kp), lambda i: (0, 0)),
        ),
    )(w_pi, w_mm, u_col)

    # ------------------------------------------------------------------
    # Kernel 2: batch-blocked fused im2col conv with the sigma-scaled weight.
    # ------------------------------------------------------------------
    def conv_kernel(x_ref, w_ref, b_ref, mf_ref, ml_ref, y_ref, xpad_ref):
        # Only the halos and (if Cin < Cp) the pad-channel interior rows need
        # zeros; the interior rows [:Cin] are fully overwritten per batch
        # element.  Done once per grid step (amortized over Bn elements);
        # a first-visit-only guard is unsafe with a "parallel" grid axis.
        zeros_halo = jnp.zeros((Cp, PADL), jnp.float32)
        xpad_ref[:, 0:PADL] = zeros_halo
        xpad_ref[:, PADL + HW:PADL + HW + PADL] = zeros_halo
        if Cp != Cin:
            xpad_ref[Cin:Cp, PADL:PADL + HW] = jnp.zeros((Cp - Cin, HW),
                                                         jnp.float32)

        mf = mf_ref[...]                                        # (1, HW)
        ml = ml_ref[...]                                        # (1, HW)

        # im2col for every batch element of this block, lane-concatenated
        # into a single (9*Cp, Bn*HW) patch matrix.
        patch_cols = []
        for b in range(Bn):                                     # static unroll
            xpad_ref[:Cin, PADL:PADL + HW] = x_ref[b]           # aligned lanes
            slabs = []
            for dy in range(3):
                for dx in range(3):
                    start = PADL + (dy - 1) * Wsp + (dx - 1)
                    slab = xpad_ref[:, start:start + HW]        # (Cp, HW)
                    if dx == 0:                                 # left tap
                        slab = slab * mf
                    elif dx == 2:                               # right tap
                        slab = slab * ml
                    slabs.append(slab)
            patch_cols.append(jnp.concatenate(slabs, axis=0))   # (9*Cp, HW)
        patches = (patch_cols[0] if Bn == 1
                   else jnp.concatenate(patch_cols, axis=1))    # (9*Cp, Bn*HW)

        # Single MXU matmul, lane-dense (Cout, Bn*HW) accumulator.
        acc = jnp.dot(w_ref[...], patches,
                      preferred_element_type=jnp.float32)       # (Cout, Bn*HW)
        y = acc + b_ref[...]                                    # conv(x,W/σ)+b

        for b in range(Bn):                                     # aligned stores
            y_ref[b] = y[:, b * HW:(b + 1) * HW].astype(y_ref.dtype)

    y_flat = pl.pallas_call(
        conv_kernel,
        out_shape=jax.ShapeDtypeStruct((N, Cout, HW), x_nchw.dtype),
        grid=(N // Bn,),
        in_specs=[
            pl.BlockSpec((Bn, Cin, HW), lambda n: (n, 0, 0)),
            pl.BlockSpec((Cout, Kp), lambda n: (0, 0)),
            pl.BlockSpec((Cout, 1), lambda n: (0, 0)),
            pl.BlockSpec((1, HW), lambda n: (0, 0)),
            pl.BlockSpec((1, HW), lambda n: (0, 0)),
        ],
        out_specs=pl.BlockSpec((Bn, Cout, HW), lambda n: (n, 0, 0)),
        scratch_shapes=[pltpu.VMEM((Cp, pad_w), jnp.float32)],
        compiler_params=pltpu.CompilerParams(
            dimension_semantics=("parallel",)),
    )(x_flat, w_sn, b_col, m_not_first, m_not_last)

    y = y_flat.reshape(N, Cout, H, Wsp)
    return y, u_out[:, 0], v_out[0, :]


# ---------------------------------------------------------------------------
# Pure-JAX reference (for correctness check).
# ---------------------------------------------------------------------------
def reference_forward(x_nchw, weight_oihw, bias, u, eps=L2_EPS):
    h = weight_oihw.shape[0]
    w2 = weight_oihw.reshape(h, -1)
    v = w2.T @ u
    v = v / (jnp.linalg.norm(v) + eps)
    u_n = w2 @ v
    u_n = u_n / (jnp.linalg.norm(u_n) + eps)
    sigma = jnp.dot(u_n, w2 @ v)
    w_sn = weight_oihw / sigma
    y = jax.lax.conv_general_dilated(
        x_nchw, w_sn, window_strides=(1, 1), padding="SAME",
        dimension_numbers=("NCHW", "OIHW", "NCHW"))
    return y + bias[None, :, None, None], u_n, v


if __name__ == "__main__":
    key = jax.random.PRNGKey(0)
    k_x, k_w, k_b, k_u = jax.random.split(key, 4)

    # Small shapes; batch=8 so the batch-blocked path (Bn=4, grid=(2,)) is
    # exercised while keeping >= 2 parallel grid steps for v7x's two TCs.
    N, Cin, Cout, H, Wsp = 8, 4, 8, 16, 16

    # PyTorch-style fan-in init for the wrapped Conv2d; u ~ N(0,1), normalized
    # (as in SpectralNorm._make_params).
    bound = 1.0 / (Cin * 9) ** 0.5
    weight = jax.random.uniform(k_w, (Cout, Cin, 3, 3), jnp.float32,
                                -bound, bound)
    bias = jax.random.uniform(k_b, (Cout,), jnp.float32, -bound, bound)
    u0 = jax.random.normal(k_u, (Cout,), jnp.float32)
    u0 = u0 / (jnp.linalg.norm(u0) + L2_EPS)
    x = jax.random.normal(k_x, (N, Cin, H, Wsp), jnp.float32)

    y, u_new, v_new = spectral_norm_conv2d_forward(x, weight, bias, u0)
    y = jax.block_until_ready(y)

    y_ref, u_ref, v_ref = reference_forward(x, weight, bias, u0)
    assert y.shape == (N, Cout, H, Wsp)
    assert jnp.allclose(y, y_ref, atol=1e-4, rtol=1e-4), \
        f"max abs err {jnp.max(jnp.abs(y - y_ref))}"
    assert jnp.allclose(u_new, u_ref, atol=1e-4, rtol=1e-4)
    assert jnp.allclose(v_new, v_ref, atol=1e-4, rtol=1e-4)

    print("KERNEL_OK")
</pallas_src>

<mosaic_0001>
module attributes {stable_mosaic.version = 11 : i64} {
  func.func @power_kernel(%arg0: i32, %arg1: memref<8x36xf32, #tpu.memory_space<vmem>>, %arg2: memref<8x72xf32, #tpu.memory_space<vmem>>, %arg3: memref<8x1xf32, #tpu.memory_space<vmem>>, %arg4: memref<8x1xf32, #tpu.memory_space<vmem>>, %arg5: memref<1x36xf32, #tpu.memory_space<vmem>>, %arg6: memref<8x72xf32, #tpu.memory_space<vmem>>) attributes {dimension_semantics = [#tpu.dimension_semantics<arbitrary>], iteration_bounds = array<i64: 1>, scalar_prefetch = 0 : i64, scratch_operands = 0 : i64, tpu.core_type = #tpu.core_type<tc>, window_params = [{pipeline_mode = #tpu.pipeline_mode<synchronous>, transform_indices = @transform_0, window_bounds = array<i64: 8, 36>}, {pipeline_mode = #tpu.pipeline_mode<synchronous>, transform_indices = @transform_1, window_bounds = array<i64: 8, 72>}, {pipeline_mode = #tpu.pipeline_mode<synchronous>, transform_indices = @transform_2, window_bounds = array<i64: 8, 1>}, {pipeline_mode = #tpu.pipeline_mode<synchronous>, transform_indices = @transform_3, window_bounds = array<i64: 8, 1>}, {pipeline_mode = #tpu.pipeline_mode<synchronous>, transform_indices = @transform_4, window_bounds = array<i64: 1, 36>}, {pipeline_mode = #tpu.pipeline_mode<synchronous>, transform_indices = @transform_5, window_bounds = array<i64: 8, 72>}]} {
    %c0 = arith.constant 0 : index
    %c0_0 = arith.constant 0 : index
    %0 = vector.load %arg1[%c0, %c0_0] : memref<8x36xf32, #tpu.memory_space<vmem>>, vector<8x36xf32>
    %c0_1 = arith.constant 0 : index
    %c0_2 = arith.constant 0 : index
    %1 = vector.load %arg3[%c0_1, %c0_2] : memref<8x1xf32, #tpu.memory_space<vmem>>, vector<8x1xf32>
    %2 = vector.broadcast %1 : vector<8x1xf32> to vector<8x36xf32>
    %3 = arith.mulf %0, %2 : vector<8x36xf32>
    %cst = arith.constant dense<0.000000e+00> : vector<36xf32>
    %4 = vector.multi_reduction <add>, %3, %cst [0] : vector<8x36xf32> to vector<36xf32>
    %5 = vector.shape_cast %4 : vector<36xf32> to vector<1x36xf32>
    %6 = arith.mulf %5, %5 : vector<1x36xf32>
    %cst_3 = arith.constant dense<0.000000e+00> : vector<1xf32>
    %7 = vector.multi_reduction <add>, %6, %cst_3 [1] : vector<1x36xf32> to vector<1xf32>
    %8 = vector.shape_cast %7 : vector<1xf32> to vector<1x1xf32>
    %9 = math.sqrt %8 : vector<1x1xf32>
    %cst_4 = arith.constant 9.99999996E-13 : f32
    %10 = vector.broadcast %cst_4 : f32 to vector<1x1xf32>
    %11 = arith.addf %9, %10 : vector<1x1xf32>
    %12 = vector.broadcast %11 : vector<1x1xf32> to vector<1x36xf32>
    %13 = arith.divf %5, %12 : vector<1x36xf32>
    %14 = vector.broadcast %13 : vector<1x36xf32> to vector<8x36xf32>
    %15 = arith.mulf %0, %14 : vector<8x36xf32>
    %cst_5 = arith.constant dense<0.000000e+00> : vector<8xf32>
    %16 = vector.multi_reduction <add>, %15, %cst_5 [1] : vector<8x36xf32> to vector<8xf32>
    %17 = vector.shape_cast %16 : vector<8xf32> to vector<8x1xf32>
    %18 = arith.mulf %17, %17 : vector<8x1xf32>
    %cst_6 = arith.constant dense<0.000000e+00> : vector<1xf32>
    %19 = vector.multi_reduction <add>, %18, %cst_6 [0] : vector<8x1xf32> to vector<1xf32>
    %20 = vector.shape_cast %19 : vector<1xf32> to vector<1x1xf32>
    %21 = math.sqrt %20 : vector<1x1xf32>
    %cst_7 = arith.constant 9.99999996E-13 : f32
    %22 = vector.broadcast %cst_7 : f32 to vector<1x1xf32>
    %23 = arith.addf %21, %22 : vector<1x1xf32>
    %24 = vector.broadcast %23 : vector<1x1xf32> to vector<8x1xf32>
    %25 = arith.divf %17, %24 : vector<8x1xf32>
    %26 = arith.mulf %25, %17 : vector<8x1xf32>
    %cst_8 = arith.constant dense<0.000000e+00> : vector<1xf32>
    %27 = vector.multi_reduction <add>, %26, %cst_8 [0] : vector<8x1xf32> to vector<1xf32>
    %28 = vector.shape_cast %27 : vector<1xf32> to vector<1x1xf32>
    %c0_9 = arith.constant 0 : index
    %c0_10 = arith.constant 0 : index
    %29 = vector.load %arg4[%c0_9, %c0_10] : memref<8x1xf32, #tpu.memory_space<vmem>>, vector<8x1xf32>
    tpu.vector_store %arg4[%c0_9, %c0_10], %25 {strides = array<i32>} : memref<8x1xf32, #tpu.memory_space<vmem>>, vector<8x1xf32>,
    %c0_11 = arith.constant 0 : index
    %c0_12 = arith.constant 0 : index
    %30 = vector.load %arg5[%c0_11, %c0_12] : memref<1x36xf32, #tpu.memory_space<vmem>>, vector<1x36xf32>
    tpu.vector_store %arg5[%c0_11, %c0_12], %13 {strides = array<i32>} : memref<1x36xf32, #tpu.memory_space<vmem>>, vector<1x36xf32>,
    %c0_13 = arith.constant 0 : index
    %c0_14 = arith.constant 0 : index
    %31 = vector.load %arg2[%c0_13, %c0_14] : memref<8x72xf32, #tpu.memory_space<vmem>>, vector<8x72xf32>
    %32 = vector.broadcast %28 : vector<1x1xf32> to vector<8x72xf32>
    %33 = arith.divf %31, %32 : vector<8x72xf32>
    %c0_15 = arith.constant 0 : index
    %c0_16 = arith.constant 0 : index
    %34 = vector.load %arg6[%c0_15, %c0_16] : memref<8x72xf32, #tpu.memory_space<vmem>>, vector<8x72xf32>
    tpu.vector_store %arg6[%c0_15, %c0_16], %33 {strides = array<i32>} : memref<8x72xf32, #tpu.memory_space<vmem>>, vector<8x72xf32>,
    return
  }
  func.func @transform_0(%arg0: i32) -> (i32, i32) {
    %c0_i32 = arith.constant 0 : i32
    %c0_i32_0 = arith.constant 0 : i32
    %c0_i32_1 = arith.constant 0 : i32
    return %c0_i32, %c0_i32_0 : i32, i32
  }
  func.func @transform_1(%arg0: i32) -> (i32, i32) {
    %c0_i32 = arith.constant 0 : i32
    %c0_i32_0 = arith.constant 0 : i32
    %c0_i32_1 = arith.constant 0 : i32
    return %c0_i32, %c0_i32_0 : i32, i32
  }
  func.func @transform_2(%arg0: i32) -> (i32, i32) {
    %c0_i32 = arith.constant 0 : i32
    %c0_i32_0 = arith.constant 0 : i32
    %c0_i32_1 = arith.constant 0 : i32
    return %c0_i32, %c0_i32_0 : i32, i32
  }
  func.func @transform_3(%arg0: i32) -> (i32, i32) {
    %c0_i32 = arith.constant 0 : i32
    %c0_i32_0 = arith.constant 0 : i32
    %c0_i32_1 = arith.constant 0 : i32
    return %c0_i32, %c0_i32_0 : i32, i32
  }
  func.func @transform_4(%arg0: i32) -> (i32, i32) {
    %c0_i32 = arith.constant 0 : i32
    %c0_i32_0 = arith.constant 0 : i32
    %c0_i32_1 = arith.constant 0 : i32
    return %c0_i32, %c0_i32_0 : i32, i32
  }
  func.func @transform_5(%arg0: i32) -> (i32, i32) {
    %c0_i32 = arith.constant 0 : i32
    %c0_i32_0 = arith.constant 0 : i32
    %c0_i32_1 = arith.constant 0 : i32
    return %c0_i32, %c0_i32_0 : i32, i32
  }
}

</mosaic_0001>

<llo_original>
// kernel: tpu_custom_call.1
$region0: #{tpu_custom_call.1}
  #allocation0 [shape = 'u32[]', space=smem, size = 0x4, offset = 0x4, fixed_abs, tag = 'smem constant byte address 0x4 - core index']
  #allocation1 [shape = 'u32[144,128]{1,0:T(1,128)}', space=vmem, size = 0x12000, scoped, tag = 'internal scratch']
  %s0 = inlined_call_operand.vmem [shape: f32[8,36], index: 0, kind: input, shape index: {}]
  %s1 = inlined_call_operand.hbm [shape: f32[8,72], index: 1, kind: input, shape index: {}]
  %s2 = inlined_call_operand.vmem [shape: f32[8,1], index: 2, kind: input, shape index: {}]
  %s3 = inlined_call_operand.vmem [shape: f32[8,1], index: 3, kind: output, shape index: {0}]
  %s4 = inlined_call_operand.hbm [shape: f32[1,36], index: 4, kind: output, shape index: {1}]
  %s5 = inlined_call_operand.hbm [shape: f32[8,72], index: 5, kind: output, shape index: {2}]
  %6 = xla_tuple %s3, %s4, %s5
  %s7 = sld [smem:[#allocation0]]
  $region42: #{tpu_custom_call.1} parent=0
    _
  %s9 = ssub.s32 1, %s7
  %s10 = scalar_select 0, %s9, %s7
  $region1: #{tpu_custom_call.1} parent=0
    #allocation2 [shape = 'u8[4096]{0}', space=vmem, size = 0x1000, scoped, tag = 'input window, operand 1, single buffered']
    #allocation3 [shape = 's32[1]{0}', space=sflag, size = 0x4, scoped, tag = 'scoped memory for tpu_custom_call.1']
    #allocation4 [shape = 's32[1]{0}', space=sflag, size = 0x4, scoped, tag = 'scoped memory for tpu_custom_call.1']
    #allocation5 [shape = 'u8[512]{0}', space=vmem, size = 0x400, scoped, tag = 'output window, operand 1, single buffered']
    #allocation6 [shape = 'u8[4096]{0}', space=vmem, size = 0x1000, scoped, tag = 'output window, operand 2, single buffered']
    #allocation7 [shape = 's32[1]{0}', space=sflag, size = 0x4, scoped, tag = 'scoped memory for tpu_custom_call.1']
    %11 = vsyncpa [#allocation3], 0
    %12 = vsyncpa [#allocation4], 0
    %13 = vsyncpa [#allocation7], 0
    // Predicated region
    $region2: #{tpu_custom_call.1} parent=1 // pred_check
      _
    $region3: #{tpu_custom_call.1} parent=1 // pred_check_branch
      %15 = sbr.rel (0) target = $region5
    $region4: #{tpu_custom_call.1} parent=1 // pred_region
      _
    $region5: #{tpu_custom_call.1} parent=1 // pred_fallthru
      _
    // Predicated region
    $region6: #{tpu_custom_call.1} parent=1 // pred_check
      _
    $region7: #{tpu_custom_call.1} parent=1 // pred_check_branch
      %17 = sbr.rel (0) target = $region9
    $region8: #{tpu_custom_call.1} parent=1 // pred_region
      %s19 = ssub.s32 128, 128
      %20 = vsyncadd [#allocation3], %s19
      %s22 = sshll.u32 [#allocation2], 4
      %s23 = int_to_ptr.vmem [resolvable:$true] %s22
      %25 = dma.hbm_to_vmem [thread:$0]  %s1, 128, %s23, [#allocation3]
    $region9: #{tpu_custom_call.1} parent=1 // pred_fallthru
      _
    // Predicated region
    $region10: #{tpu_custom_call.1} parent=1 // pred_check
      _
    $region11: #{tpu_custom_call.1} parent=1 // pred_check_branch
      %27 = sbr.rel (0) target = $region13
    $region12: #{tpu_custom_call.1} parent=1 // pred_region
      _
    $region13: #{tpu_custom_call.1} parent=1 // pred_fallthru
      _
    // Predicated region
    $region14: #{tpu_custom_call.1} parent=1 // pred_check
      _
    $region15: #{tpu_custom_call.1} parent=1 // pred_check_branch
      %29 = sbr.rel (0) target = $region17
    $region16: #{tpu_custom_call.1} parent=1 // pred_region
      %30 = dma.done [#allocation3], 128
    $region17: #{tpu_custom_call.1} parent=1 // pred_fallthru
      _
    %v31 = vld [vmem:[%s0] sm:$0xff]
    %v32 = vld [vmem:[%s2] sm:$0xff]
    %34 = vset.pattern.permute.xlu0 0
    %35 = vperm.xlu0 %34, %v32
    %v36 = vpop.permute.xlu0 %35
    %v38 = vmul.f32 %v31, %v36
    %vm39 = vcmask 293888
    %v40 = vsel %vm39, %v38, 0.0
    %v41 = vrot.slane %v40, 4
    %v42 = vadd.f32 %v40, %v41
    %v43 = vrot.slane %v42, 2
    %v44 = vadd.f32 %v42, %v43
    %v45 = vrot.slane %v44, 1
    %v46 = vadd.f32 %v44, %v45
    %v47 = vmul.f32 %v46, %v46
    %v48 = vsel %vm39, %v47, 0.0
    %49 = vadd.xlane.f32.xlu0 %v48
    %v50 = vpop.xlane.xlu0 %49
    %v51 = vrsqrt.pop %v50
    %v52 = vmul.f32 %v50, %v51
    %vm53 = vcmp.eq.f32.partialorder %v50, inf
    %v54 = vsel %vm53, %v50, %v52
    %vm55 = vcmp.eq.f32.partialorder %v50, 0.0
    %v56 = vand.u32 %v50, 2147483648
    %v57 = vsel %vm55, %v56, %v54
    %v58 = vadd.f32 %v57, 1e-12
    %v59 = vrcp.pop %v58
    %v60 = vmul.f32 %v46, %v59
    %v61 = vmul.f32 %v31, %v60
    %v62 = vsel %vm39, %v61, 0.0
    %63 = vadd.xlane.f32.xlu0 %v62
    %v64 = vpop.xlane.xlu0 %63
    %v65 = vmul.f32 %v64, %v64
    %v66 = vrot.slane %v65, 4
    %v67 = vadd.f32 %v65, %v66
    %v68 = vrot.slane %v67, 2
    %v69 = vadd.f32 %v67, %v68
    %v70 = vrot.slane %v69, 1
    %v71 = vadd.f32 %v69, %v70
    %v72 = vrsqrt.pop %v71
    %v73 = vmul.f32 %v71, %v72
    %vm74 = vcmp.eq.f32.partialorder %v71, inf
    %v75 = vsel %vm74, %v71, %v73
    %vm76 = vcmp.eq.f32.partialorder %v71, 0.0
    %v77 = vand.u32 %v71, 2147483648
    %v78 = vsel %vm76, %v77, %v75
    %v79 = vadd.f32 %v78, 1e-12
    %v80 = vrcp.pop %v79
    %v81 = vmul.f32 %v64, %v80
    %v82 = vmul.f32 %v81, %v64
    %v83 = vrot.slane %v82, 4
    %v84 = vadd.f32 %v82, %v83
    %v85 = vrot.slane %v84, 2
    %v86 = vadd.f32 %v84, %v85
    %v87 = vrot.slane %v86, 1
    %v88 = vadd.f32 %v86, %v87
    %vm89 = vcmask 7168
    %90 = vst.msk [vmem:[%s3] sm:$0xff] %vm89, %v81
    %vm91 = vcmask 286720
    %92 = vst.msk [vmem:[#allocation5] sm:$0x1] %vm91, %v60
    %v93 = vld [vmem:[#allocation2] sm:$0xff]
    %v94 = vrcp.pop %v88
    %v95 = vmul.f32 %v93, %v94
    %vm96 = vcmask 588800
    %97 = vst.msk [vmem:[#allocation6] sm:$0xff] %vm96, %v95
    // Predicated region
    $region18: #{tpu_custom_call.1} parent=1 // pred_check
      _
    $region19: #{tpu_custom_call.1} parent=1 // pred_check_branch
      %99 = sbr.rel (0) target = $region21
    $region20: #{tpu_custom_call.1} parent=1 // pred_region
      _
    $region21: #{tpu_custom_call.1} parent=1 // pred_fallthru
      _
    // Predicated region
    $region22: #{tpu_custom_call.1} parent=1 // pred_check
      _
    $region23: #{tpu_custom_call.1} parent=1 // pred_check_branch
      %101 = sbr.rel (0) target = $region25
    $region24: #{tpu_custom_call.1} parent=1 // pred_region
      %s103 = ssub.s32 16, 16
      %104 = vsyncadd [#allocation4], %s103
      %s106 = sshll.u32 [#allocation5], 4
      %s107 = int_to_ptr.vmem [resolvable:$true] %s106
      %109 = dma.vmem_to_hbm [thread:$0]  %s107, 16, %s4, [#allocation4]
    $region25: #{tpu_custom_call.1} parent=1 // pred_fallthru
      _
    // Predicated region
    $region26: #{tpu_custom_call.1} parent=1 // pred_check
      _
    $region27: #{tpu_custom_call.1} parent=1 // pred_check_branch
      %111 = sbr.rel (0) target = $region29
    $region28: #{tpu_custom_call.1} parent=1 // pred_region
      %s113 = ssub.s32 128, 128
      %114 = vsyncadd [#allocation7], %s113
      %s116 = sshll.u32 [#allocation6], 4
      %s117 = int_to_ptr.vmem [resolvable:$true] %s116
      %119 = dma.vmem_to_hbm [thread:$0]  %s117, 128, %s5, [#allocation7]
    $region29: #{tpu_custom_call.1} parent=1 // pred_fallthru
      _
    // Predicated region
    $region30: #{tpu_custom_call.1} parent=1 // pred_check
      _
    $region31: #{tpu_custom_call.1} parent=1 // pred_check_branch
      %121 = sbr.rel (0) target = $region33
    $region32: #{tpu_custom_call.1} parent=1 // pred_region
      _
    $region33: #{tpu_custom_call.1} parent=1 // pred_fallthru
      _
    // Predicated region
    $region34: #{tpu_custom_call.1} parent=1 // pred_check
      _
    $region35: #{tpu_custom_call.1} parent=1 // pred_check_branch
      %123 = sbr.rel (0) target = $region37
    $region36: #{tpu_custom_call.1} parent=1 // pred_region
      %124 = dma.done [#allocation4], 16
    $region37: #{tpu_custom_call.1} parent=1 // pred_fallthru
      _
    // Predicated region
    $region38: #{tpu_custom_call.1} parent=1 // pred_check
      _
    $region39: #{tpu_custom_call.1} parent=1 // pred_check_branch
      %126 = sbr.rel (0) target = $region41
    $region40: #{tpu_custom_call.1} parent=1 // pred_region
      %127 = dma.done [#allocation7], 128
    $region41: #{tpu_custom_call.1} parent=1 // pred_fallthru
      _
    %128 = vsyncpa [#allocation3], 1
    %129 = vsyncpa [#allocation4], 1
    %130 = vsyncpa [#allocation7], 1

</llo_original>
